<compile_context>
chip_gen: v6e
topology: v6e:2x2x1
jax: 0.10.0
libtpu: 0.0.40
codegen_flags: <defaults>
</compile_context>

<pallas_src>
import jax
import jax.numpy as jnp
from jax.experimental import pallas as pl
from jax.experimental.pallas import tpu as pltpu

IN_FEATURES = 8
OUT_FEATURES = 20

# Pack 32 logical rows per kernel row: 32 is the smallest factor that makes
# both the packed input width (32*8 = 256) and packed output width
# (32*20 = 640) multiples of the 128-lane vreg width.
PACK = 32
K_PACKED = PACK * IN_FEATURES    # 256
N_PACKED = PACK * OUT_FEATURES   # 640

# Packed rows per grid step.  1024 packed rows = 32768 logical rows.
# Double-buffered VMEM: 2*(1 MiB x-tile + 2.5 MiB out-tile) + ~1.3 MiB resident
# weight/bias ~= 8.3 MiB -> safe on v5e (16 MiB scoped default), v6e, and v7x
# (64 MiB physical VMEM).
MAX_TILE_PACKED = 1024


def _round_up(n, m):
    return ((n + m - 1) // m) * m


def _packed_linear_kernel(x_ref, w_ref, b_ref, o_ref):
    # x_ref: (tile, 256), w_ref: (256, 640) block-diagonal W^T, b_ref: (1, 640),
    # o_ref: (tile, 640).  f32 accumulation on the MXU; lane-dense store.
    acc = jnp.dot(x_ref[...], w_ref[...], preferred_element_type=jnp.float32)
    o_ref[...] = (acc + b_ref[...]).astype(o_ref.dtype)


@jax.jit
def perceptron_forward(x, weight, bias):
    """x: (B, 8) f32, weight: (20, 8) f32 (PyTorch layout), bias: (20,) f32 -> (B, 20) f32."""
    B, in_f = x.shape
    out_f = weight.shape[0]

    # Pad only up to the next multiple of PACK.  For the common case
    # (B % 32 == 0) there is no wrapper-side copy at all: the reshapes below
    # and the final output reshape are free views of contiguous data.
    pad = (-B) % PACK
    if pad:
        x = jnp.pad(x, ((0, pad), (0, 0)))
    num_packed = (B + pad) // PACK

    x_packed = x.reshape(num_packed, PACK * in_f)                   # free reshape
    w_bd = jnp.kron(jnp.eye(PACK, dtype=weight.dtype), weight.T)    # (256, 640)
    b_packed = jnp.tile(bias, PACK).reshape(1, PACK * out_f)        # (1, 640)

    # Tile selection: a single full block for tiny batches; otherwise a
    # multiple of 8 (sublane tiling), capped at MAX_TILE_PACKED and sized so
    # the grid has at least 2 steps (megacore sharding on v7x).
    if num_packed <= 8:
        tile = num_packed
    else:
        tile = min(MAX_TILE_PACKED, _round_up(pl.cdiv(num_packed, 2), 8))
    # Last block may be partial: OOB writes are dropped, so no pad to a tile
    # multiple and no trailing slice is needed.
    grid = (pl.cdiv(num_packed, tile),)

    # Explicit scoped-VMEM budget: double-buffered x/out tiles + resident
    # block-diagonal weight & bias + headroom.
    vmem_limit = int(
        2 * (tile * PACK * in_f * 4 + tile * PACK * out_f * 4)
        + 2 * (PACK * in_f * PACK * out_f * 4 + 8 * PACK * out_f * 4)
        + (4 << 20)
    )

    out_packed = pl.pallas_call(
        _packed_linear_kernel,
        out_shape=jax.ShapeDtypeStruct((num_packed, PACK * out_f), x.dtype),
        grid=grid,
        in_specs=[
            pl.BlockSpec((tile, PACK * in_f), lambda i: (i, 0)),          # x streams
            pl.BlockSpec((PACK * in_f, PACK * out_f), lambda i: (0, 0)),  # W resident
            pl.BlockSpec((1, PACK * out_f), lambda i: (0, 0)),            # b resident
        ],
        out_specs=pl.BlockSpec((tile, PACK * out_f), lambda i: (i, 0)),
        compiler_params=pltpu.CompilerParams(
            dimension_semantics=("parallel",),
            vmem_limit_bytes=vmem_limit,
        ),
    )(x_packed, w_bd, b_packed)

    out = out_packed.reshape(num_packed * PACK, out_f)   # free reshape
    if pad:
        out = out[:B]
    return out


def init_params(key, in_features=IN_FEATURES, out_features=OUT_FEATURES):
    """Deterministic init matching the PyTorch module:
       weight ~ xavier_normal_, bias ~ U(-1/sqrt(fan_in), 1/sqrt(fan_in)) (nn.Linear default)."""
    k_w, k_b = jax.random.split(key)
    xavier_std = (2.0 / (in_features + out_features)) ** 0.5
    weight = xavier_std * jax.random.normal(k_w, (out_features, in_features), jnp.float32)
    bound = 1.0 / (in_features ** 0.5)
    bias = jax.random.uniform(k_b, (out_features,), jnp.float32, minval=-bound, maxval=bound)
    return weight, bias


if __name__ == "__main__":
    key = jax.random.PRNGKey(0)
    k_x, k_p, k_mid, k_big = jax.random.split(key, 4)

    weight, bias = init_params(k_p)

    # Small batch consistent with the module (Linear(8, 20)).
    B = 4
    x = jax.random.normal(k_x, (B, IN_FEATURES), jnp.float32)
    out = jax.block_until_ready(perceptron_forward(x, weight, bias))
    ref = x @ weight.T + bias
    assert out.shape == (B, OUT_FEATURES)
    assert jnp.allclose(out, ref, atol=1e-5, rtol=1e-5)

    # Streamed path, B % 32 == 0 -> zero wrapper copies, grid >= 2.
    B_mid = 8192
    x_mid = jax.random.normal(k_mid, (B_mid, IN_FEATURES), jnp.float32)
    out_mid = jax.block_until_ready(perceptron_forward(x_mid, weight, bias))
    ref_mid = x_mid @ weight.T + bias
    assert out_mid.shape == (B_mid, OUT_FEATURES)
    assert jnp.allclose(out_mid, ref_mid, atol=1e-5, rtol=1e-5)

    # Non-divisible batch: exercises the minimal pad and the partial last block.
    B_big = 4099
    x_big = jax.random.normal(k_big, (B_big, IN_FEATURES), jnp.float32)
    out_big = jax.block_until_ready(perceptron_forward(x_big, weight, bias))
    ref_big = x_big @ weight.T + bias
    assert out_big.shape == (B_big, OUT_FEATURES)
    assert jnp.allclose(out_big, ref_big, atol=1e-5, rtol=1e-5)

    print("KERNEL_OK")
</pallas_src>

<mosaic_0001>
module attributes {stable_mosaic.version = 11 : i64} {
  func.func @_packed_linear_kernel(%arg0: i32, %arg1: memref<1x256xf32, #tpu.memory_space<vmem>>, %arg2: memref<256x640xf32, #tpu.memory_space<vmem>>, %arg3: memref<1x640xf32, #tpu.memory_space<vmem>>, %arg4: memref<1x640xf32, #tpu.memory_space<vmem>>) attributes {dimension_semantics = [#tpu.dimension_semantics<parallel>], iteration_bounds = array<i64: 1>, scalar_prefetch = 0 : i64, scratch_operands = 0 : i64, tpu.core_type = #tpu.core_type<tc>, window_params = [{transform_indices = @transform_0, window_bounds = array<i64: 1, 256>}, {pipeline_mode = #tpu.pipeline_mode<synchronous>, transform_indices = @transform_1, window_bounds = array<i64: 256, 640>}, {pipeline_mode = #tpu.pipeline_mode<synchronous>, transform_indices = @transform_2, window_bounds = array<i64: 1, 640>}, {transform_indices = @transform_3, window_bounds = array<i64: 1, 640>}]} {
    %c0 = arith.constant 0 : index
    %c0_0 = arith.constant 0 : index
    %0 = vector.load %arg1[%c0, %c0_0] : memref<1x256xf32, #tpu.memory_space<vmem>>, vector<1x256xf32>
    %c0_1 = arith.constant 0 : index
    %c0_2 = arith.constant 0 : index
    %1 = vector.load %arg2[%c0_1, %c0_2] : memref<256x640xf32, #tpu.memory_space<vmem>>, vector<256x640xf32>
    %cst = arith.constant dense<0.000000e+00> : vector<1x640xf32>
    %2 = tpu.matmul %0, %1, %cst {dimension_numbers = #tpu.dot_dimension_numbers<[1], [0], [0], [1], [0, 0, 1, 1], [], []>} : vector<1x256xf32>, vector<256x640xf32>, vector<1x640xf32> -> vector<1x640xf32>
    %c0_3 = arith.constant 0 : index
    %c0_4 = arith.constant 0 : index
    %3 = vector.load %arg3[%c0_3, %c0_4] : memref<1x640xf32, #tpu.memory_space<vmem>>, vector<1x640xf32>
    %4 = arith.addf %2, %3 : vector<1x640xf32>
    %c0_5 = arith.constant 0 : index
    %c0_6 = arith.constant 0 : index
    %5 = vector.load %arg4[%c0_5, %c0_6] : memref<1x640xf32, #tpu.memory_space<vmem>>, vector<1x640xf32>
    tpu.vector_store %arg4[%c0_5, %c0_6], %4 {strides = array<i32>} : memref<1x640xf32, #tpu.memory_space<vmem>>, vector<1x640xf32>,
    return
  }
  func.func @transform_0(%arg0: i32) -> (i32, i32) {
    %c0_i32 = arith.constant 0 : i32
    %c0_i32_0 = arith.constant 0 : i32
    return %arg0, %c0_i32 : i32, i32
  }
  func.func @transform_1(%arg0: i32) -> (i32, i32) {
    %c0_i32 = arith.constant 0 : i32
    %c0_i32_0 = arith.constant 0 : i32
    %c0_i32_1 = arith.constant 0 : i32
    return %c0_i32, %c0_i32_0 : i32, i32
  }
  func.func @transform_2(%arg0: i32) -> (i32, i32) {
    %c0_i32 = arith.constant 0 : i32
    %c0_i32_0 = arith.constant 0 : i32
    %c0_i32_1 = arith.constant 0 : i32
    return %c0_i32, %c0_i32_0 : i32, i32
  }
  func.func @transform_3(%arg0: i32) -> (i32, i32) {
    %c0_i32 = arith.constant 0 : i32
    %c0_i32_0 = arith.constant 0 : i32
    return %arg0, %c0_i32 : i32, i32
  }
}

</mosaic_0001>

<llo_original>
// kernel: tile.8
$region0: #{tile.8}
  #allocation0 [shape = 's32[1]{0}', space=sflag, size = 0x4, scoped, tag = 'scoped memory for tile.8']
  %s0 = inlined_call_operand.vmem [shape: f32[20], index: 0, kind: input, shape index: {}]
  %s1 = inlined_call_operand.vmem [shape: f32[32,20], index: 1, kind: output, shape index: {}]
  // Predicated region
  $region2: #{tile.8} parent=0 // pred_check
    _
  $region3: #{tile.8} parent=0 // pred_check_branch
    %3 = sbr.rel (0) target = $region5
  $region4: #{tile.8} parent=0 // pred_region
    _
  $region5: #{tile.8} parent=0 // pred_fallthru
    _
  %v4 = vld [vmem:[%s0] ss:$0 sm:$0xff]
  %5 = vst [vmem:[%s1] sm:$0xff] %v4
  %s6 = scalar_lea.vmem %s1, 8
  %7 = vst [vmem:[%s6] sm:$0xff] %v4
  %s8 = scalar_lea.vmem %s1, 16
  %9 = vst [vmem:[%s8] sm:$0xff] %v4
  %s10 = scalar_lea.vmem %s1, 24
  %11 = vst [vmem:[%s10] sm:$0xff] %v4

// kernel: tile.9
$region0: #{tile.9}
  %s0 = inlined_call_operand.vmem [shape: f32[32,20], index: 0, kind: input, shape index: {}]
  %s1 = inlined_call_operand.vmem [shape: f32[1,640], index: 1, kind: output, shape index: {}]
  $region1: #{tile.9} parent=0
    #allocation0 [shape = 'u8[20480]{0}', space=vmem, size = 0x5000, scoped, tag = 'scoped mem for output reshape']
    %v2 = vld [vmem:[%s0] sm:$0x1]
    %vm3 = vcmask 162816
    %4 = vst.msk [vmem:[#allocation0] sm:$0x1] %vm3, %v2
    %s5 = scalar_lea.vmem %s0, 19
    %v6 = vld [vmem:[%s5] sm:$0x1]
    %s7 = scalar_lea.vmem %s0, 19
    %v8 = vld [vmem:[%s7] sm:$0x1]
    %vm9 = vcmask 31744
    %v10 = vsel %vm9, %v8, %v6
    %11 = vrot.lane.b32.xlu0 %v10, 124
    %v12 = vpop.permute.xlu0 %11
    %vm13 = vcmask 130048
    %s14 = scalar_lea.vmem [#allocation0], 24
    %15 = vst.msk [vmem:[%s14] sm:$0x1] %vm13, %v12
    %vm16 = vcmask 1048544
    %s17 = scalar_lea.vmem [#allocation0], 16
    %18 = vst.msk [vmem:[%s17] sm:$0x1] %vm16, %v12
    %s19 = scalar_lea.vmem %s0, 6
    %v20 = vld [vmem:[%s19] sm:$0x1]
    %s21 = scalar_lea.vmem %s0, 6
    %v22 = vld [vmem:[%s21] sm:$0x1]
    %vm23 = vcmask 64512
    %v24 = vsel %vm23, %v22, %v20
    %25 = vrot.lane.b32.xlu0 %v24, 120
    %v26 = vpop.permute.xlu0 %25
    %vm27 = vcmask 97280
    %s28 = scalar_lea.vmem [#allocation0], 8
    %29 = vst.msk [vmem:[%s28] sm:$0x1] %vm27, %v26
    %vm30 = vcmask 1048512
    %31 = vst.msk [vmem:[#allocation0] sm:$0x1] %vm30, %v26
    %s32 = scalar_lea.vmem %s0, 25
    %v33 = vld [vmem:[%s32] sm:$0x1]
    %s34 = scalar_lea.vmem %s0, 25
    %v35 = vld [vmem:[%s34] sm:$0x1]
    %vm36 = vcmask 97280
    %v37 = vsel %vm36, %v35, %v33
    %38 = vrot.lane.b32.xlu0 %v37, 116
    %v39 = vpop.permute.xlu0 %38
    %vm40 = vcmask 64512
    %s41 = scalar_lea.vmem [#allocation0], 32
    %42 = vst.msk [vmem:[%s41] sm:$0x1] %vm40, %v39
    %vm43 = vcmask 1048480
    %s44 = scalar_lea.vmem [#allocation0], 24
    %45 = vst.msk [vmem:[%s44] sm:$0x1] %vm43, %v39
    %s46 = scalar_lea.vmem %s0, 12
    %v47 = vld [vmem:[%s46] sm:$0x1]
    %s48 = scalar_lea.vmem %s0, 12
    %v49 = vld [vmem:[%s48] sm:$0x1]
    %vm50 = vcmask 130048
    %v51 = vsel %vm50, %v49, %v47
    %52 = vrot.lane.b32.xlu0 %v51, 112
    %v53 = vpop.permute.xlu0 %52
    %vm54 = vcmask 31744
    %s55 = scalar_lea.vmem [#allocation0], 16
    %56 = vst.msk [vmem:[%s55] sm:$0x1] %vm54, %v53
    %vm57 = vcmask 1048448
    %s58 = scalar_lea.vmem [#allocation0], 8
    %59 = vst.msk [vmem:[%s58] sm:$0x1] %vm57, %v53
    %s60 = scalar_lea.vmem %s0, 31
    %v61 = vld [vmem:[%s60] sm:$0x1]
    %62 = vrot.lane.b32.xlu0 %v61, 108
    %v63 = vpop.permute.xlu0 %62
    %vm64 = vcmask 1048416
    %s65 = scalar_lea.vmem [#allocation0], 32
    %66 = vst.msk [vmem:[%s65] sm:$0x1] %vm64, %v63
    %s67 = scalar_lea.vmem %s0, 18
    %v68 = vld [vmem:[%s67] sm:$0x1]
    %69 = vrot.lane.b32.xlu0 %v68, 104
    %v70 = vpop.permute.xlu0 %69
    %vm71 = vcmask 1015616
    %s72 = scalar_lea.vmem [#allocation0], 16
    %73 = vst.msk [vmem:[%s72] sm:$0x1] %vm71, %v70
    %s74 = scalar_lea.vmem %s0, 5
    %v75 = vld [vmem:[%s74] sm:$0x1]
    %76 = vrot.lane.b32.xlu0 %v75, 100
    %v77 = vpop.permute.xlu0 %76
    %vm78 = vcmask 982816
    %79 = vst.msk [vmem:[#allocation0] sm:$0x1] %vm78, %v77
    %s80 = scalar_lea.vmem %s0, 24
    %v81 = vld [vmem:[%s80] sm:$0x1]
    %82 = vrot.lane.b32.xlu0 %v81, 96
    %v83 = vpop.permute.xlu0 %82
    %vm84 = vcmask 950016
    %s85 = scalar_lea.vmem [#allocation0], 24
    %86 = vst.msk [vmem:[%s85] sm:$0x1] %vm84, %v83
    %s87 = scalar_lea.vmem %s0, 11
    %v88 = vld [vmem:[%s87] sm:$0x1]
    %89 = vrot.lane.b32.xlu0 %v88, 92
    %v90 = vpop.permute.xlu0 %89
    %vm91 = vcmask 917216
    %s92 = scalar_lea.vmem [#allocation0], 8
    %93 = vst.msk [vmem:[%s92] sm:$0x1] %vm91, %v90
    %s94 = scalar_lea.vmem %s0, 30
    %v95 = vld [vmem:[%s94] sm:$0x1]
    %96 = vrot.lane.b32.xlu0 %v95, 88
    %v97 = vpop.permute.xlu0 %96
    %vm98 = vcmask 884416
    %s99 = scalar_lea.vmem [#allocation0], 32
    %100 = vst.msk [vmem:[%s99] sm:$0x1] %vm98, %v97
    %s101 = scalar_lea.vmem %s0, 17
    %v102 = vld [vmem:[%s101] sm:$0x1]
    %103 = vrot.lane.b32.xlu0 %v102, 84
    %v104 = vpop.permute.xlu0 %103
    %vm105 = vcmask 851616
    %s106 = scalar_lea.vmem [#allocation0], 16
    %107 = vst.msk [vmem:[%s106] sm:$0x1] %vm105, %v104
    %s108 = scalar_lea.vmem %s0, 4
    %v109 = vld [vmem:[%s108] sm:$0x1]
    %110 = vrot.lane.b32.xlu0 %v109, 80
    %v111 = vpop.permute.xlu0 %110
    %vm112 = vcmask 818816
    %113 = vst.msk [vmem:[#allocation0] sm:$0x1] %vm112, %v111
    %s114 = scalar_lea.vmem %s0, 23
    %v115 = vld [vmem:[%s114] sm:$0x1]
    %116 = vrot.lane.b32.xlu0 %v115, 76
    %v117 = vpop.permute.xlu0 %116
    %vm118 = vcmask 786016
    %s119 = scalar_lea.vmem [#allocation0], 24
    %120 = vst.msk [vmem:[%s119] sm:$0x1] %vm118, %v117
    %s121 = scalar_lea.vmem %s0, 10
    %v122 = vld [vmem:[%s121] sm:$0x1]
    %123 = vrot.lane.b32.xlu0 %v122, 72
    %v124 = vpop.permute.xlu0 %123
    %vm125 = vcmask 753216
    %s126 = scalar_lea.vmem [#allocation0], 8
    %127 = vst.msk [vmem:[%s126] sm:$0x1] %vm125, %v124
    %s128 = scalar_lea.vmem %s0, 29
    %v129 = vld [vmem:[%s128] sm:$0x1]
    %130 = vrot.lane.b32.xlu0 %v129, 68
    %v131 = vpop.permute.xlu0 %130
    %vm132 = vcmask 720416
    %s133 = scalar_lea.vmem [#allocation0], 32
    %134 = vst.msk [vmem:[%s133] sm:$0x1] %vm132, %v131
    %s135 = scalar_lea.vmem %s0, 16
    %v136 = vld [vmem:[%s135] sm:$0x1]
    %137 = vrot.lane.b32.xlu0 %v136, 64
    %v138 = vpop.permute.xlu0 %137
    %vm139 = vcmask 687616
    %s140 = scalar_lea.vmem [#allocation0], 16
    %141 = vst.msk [vmem:[%s140] sm:$0x1] %vm139, %v138
    %s142 = scalar_lea.vmem %s0, 3
    %v143 = vld [vmem:[%s142] sm:$0x1]
    %144 = vrot.lane.b32.xlu0 %v143, 60
    %v145 = vpop.permute.xlu0 %144
    %vm146 = vcmask 654816
    %147 = vst.msk [vmem:[#allocation0] sm:$0x1] %vm146, %v145
    %s148 = scalar_lea.vmem %s0, 22
    %v149 = vld [vmem:[%s148] sm:$0x1]
    %150 = vrot.lane.b32.xlu0 %v149, 56
    %v151 = vpop.permute.xlu0 %150
    %vm152 = vcmask 622016
    %s153 = scalar_lea.vmem [#allocation0], 24
    %154 = vst.msk [vmem:[%s153] sm:$0x1] %vm152, %v151
    %s155 = scalar_lea.vmem %s0, 9
    %v156 = vld [vmem:[%s155] sm:$0x1]
    %157 = vrot.lane.b32.xlu0 %v156, 52
    %v158 = vpop.permute.xlu0 %157
    %vm159 = vcmask 589216
    %s160 = scalar_lea.vmem [#allocation0], 8
    %161 = vst.msk [vmem:[%s160] sm:$0x1] %vm159, %v158
    %s162 = scalar_lea.vmem %s0, 28
    %v163 = vld [vmem:[%s162] sm:$0x1]
    %164 = vrot.lane.b32.xlu0 %v163, 48
    %v165 = vpop.permute.xlu0 %164
    %vm166 = vcmask 556416
    %s167 = scalar_lea.vmem [#allocation0], 32
    %168 = vst.msk [vmem:[%s167] sm:$0x1] %vm166, %v165
    %s169 = scalar_lea.vmem %s0, 15
    %v170 = vld [vmem:[%s169] sm:$0x1]
    %171 = vrot.lane.b32.xlu0 %v170, 44
    %v172 = vpop.permute.xlu0 %171
    %vm173 = vcmask 523616
    %s174 = scalar_lea.vmem [#allocation0], 16
    %175 = vst.msk [vmem:[%s174] sm:$0x1] %vm173, %v172
    %s176 = scalar_lea.vmem %s0, 2
    %v177 = vld [vmem:[%s176] sm:$0x1]
    %178 = vrot.lane.b32.xlu0 %v177, 40
    %v179 = vpop.permute.xlu0 %178
    %vm180 = vcmask 490816
    %181 = vst.msk [vmem:[#allocation0] sm:$0x1] %vm180, %v179
    %s182 = scalar_lea.vmem %s0, 21
    %v183 = vld [vmem:[%s182] sm:$0x1]
    %184 = vrot.lane.b32.xlu0 %v183, 36
    %v185 = vpop.permute.xlu0 %184
    %vm186 = vcmask 458016
    %s187 = scalar_lea.vmem [#allocation0], 24
    %188 = vst.msk [vmem:[%s187] sm:$0x1] %vm186, %v185
    %s189 = scalar_lea.vmem %s0, 8
    %v190 = vld [vmem:[%s189] sm:$0x1]
    %191 = vrot.lane.b32.xlu0 %v190, 32
    %v192 = vpop.permute.xlu0 %191
    %vm193 = vcmask 425216
    %s194 = scalar_lea.vmem [#allocation0], 8
    %195 = vst.msk [vmem:[%s194] sm:$0x1] %vm193, %v192
    %s196 = scalar_lea.vmem %s0, 27
    %v197 = vld [vmem:[%s196] sm:$0x1]
    %198 = vrot.lane.b32.xlu0 %v197, 28
    %v199 = vpop.permute.xlu0 %198
    %vm200 = vcmask 392416
    %s201 = scalar_lea.vmem [#allocation0], 32
    %202 = vst.msk [vmem:[%s201] sm:$0x1] %vm200, %v199
    %s203 = scalar_lea.vmem %s0, 14
    %v204 = vld [vmem:[%s203] sm:$0x1]
    %205 = vrot.lane.b32.xlu0 %v204, 24
    %v206 = vpop.permute.xlu0 %205
    %vm207 = vcmask 359616
    %s208 = scalar_lea.vmem [#allocation0], 16
    %209 = vst.msk [vmem:[%s208] sm:$0x1] %vm207, %v206
    %s210 = scalar_lea.vmem %s0, 1
    %v211 = vld [vmem:[%s210] sm:$0x1]
    %212 = vrot.lane.b32.xlu0 %v211, 20
    %v213 = vpop.permute.xlu0 %212
    %vm214 = vcmask 326816
    %215 = vst.msk [vmem:[#allocation0] sm:$0x1] %vm214, %v213
    %s216 = scalar_lea.vmem %s0, 20
    %v217 = vld [vmem:[%s216] sm:$0x1]
    %218 = vrot.lane.b32.xlu0 %v217, 16
    %v219 = vpop.permute.xlu0 %218
    %vm220 = vcmask 294016
    %s221 = scalar_lea.vmem [#allocation0], 24
    %222 = vst.msk [vmem:[%s221] sm:$0x1] %vm220, %v219
    %s223 = scalar_lea.vmem %s0, 7
    %v224 = vld [vmem:[%s223] sm:$0x1]
    %225 = vrot.lane.b32.xlu0 %v224, 12
    %v226 = vpop.permute.xlu0 %225
    %vm227 = vcmask 261216
    %s228 = scalar_lea.vmem [#allocation0], 8
    %229 = vst.msk [vmem:[%s228] sm:$0x1] %vm227, %v226
    %s230 = scalar_lea.vmem %s0, 26
    %v231 = vld [vmem:[%s230] sm:$0x1]
    %232 = vrot.lane.b32.xlu0 %v231, 8
    %v233 = vpop.permute.xlu0 %232
    %vm234 = vcmask 228416
    %s235 = scalar_lea.vmem [#allocation0], 32
    %236 = vst.msk [vmem:[%s235] sm:$0x1] %vm234, %v233
    %s237 = scalar_lea.vmem %s0, 13
    %v238 = vld [vmem:[%s237] sm:$0x1]
    %239 = vrot.lane.b32.xlu0 %v238, 4
    %v240 = vpop.permute.xlu0 %239
    %vm241 = vcmask 195616
    %s242 = scalar_lea.vmem [#allocation0], 16
    %243 = vst.msk [vmem:[%s242] sm:$0x1] %vm241, %v240
    %s245 = sshll.u32 1, 1
    %s246 = ssub.s32 %s245, 1
    %v248 = vld [vmem:[#allocation0] sm:%s246]
    %s249 = sshll.u32 1, 1
    %s250 = ssub.s32 %s249, 1
    %251 = vst [vmem:[%s1] sm:%s250] %v248
    %s252 = scalar_lea.vmem [#allocation0], 8
    %v253 = vld [vmem:[%s252] sm:%s246]
    %s254 = sshll.u32 1, 1
    %s255 = ssub.s32 %s254, 1
    %s256 = scalar_lea.vmem %s1, 1
    %257 = vst [vmem:[%s256] sm:%s255] %v253
    %s258 = scalar_lea.vmem [#allocation0], 16
    %v259 = vld [vmem:[%s258] sm:%s246]
    %s260 = sshll.u32 1, 1
    %s261 = ssub.s32 %s260, 1
    %s262 = smul.addr 1, 2
    %s263 = scalar_lea.vmem %s1, %s262
    %264 = vst [vmem:[%s263] sm:%s261] %v259
    %s265 = scalar_lea.vmem [#allocation0], 24
    %v266 = vld [vmem:[%s265] sm:%s246]
    %s267 = sshll.u32 1, 1
    %s268 = ssub.s32 %s267, 1
    %s269 = smul.addr 1, 3
    %s270 = scalar_lea.vmem %s1, %s269
    %271 = vst [vmem:[%s270] sm:%s268] %v266
    %s272 = scalar_lea.vmem [#allocation0], 32
    %v273 = vld [vmem:[%s272] sm:%s246]
    %s274 = sshll.u32 1, 1
    %s275 = ssub.s32 %s274, 1
    %s276 = smul.addr 1, 4
    %s277 = scalar_lea.vmem %s1, %s276
    %278 = vst [vmem:[%s277] sm:%s275] %v273

// kernel: perceptron_forward.1
$region0: #{perceptron_forward.1}
  #allocation0 [shape = 'u32[]', space=smem, size = 0x4, offset = 0x4, fixed_abs, tag = 'smem constant byte address 0x4 - core index']
  #allocation1 [shape = 'u32[144,128]{1,0:T(1,128)}', space=vmem, size = 0x12000, scoped, tag = 'internal scratch']
  %s0 = inlined_call_operand.vmem [shape: f32[1,256], index: 0, kind: input, shape index: {}]
  %s1 = inlined_call_operand.vmem [shape: f32[256,640], index: 1, kind: input, shape index: {}]
  %s2 = inlined_call_operand.vmem [shape: f32[1,640], index: 2, kind: input, shape index: {}]
  %s3 = inlined_call_operand.vmem [shape: f32[1,640], index: 3, kind: output, shape index: {}]
  %s4 = sld [smem:[#allocation0]]
  $region22: #{perceptron_forward.1} parent=0
    _
  %s6 = ssub.s32 1, %s4
  %s7 = scalar_select 0, %s6, %s4
  // Predicated region
  $region2: #{perceptron_forward.1} parent=0 // pred_check
    _
  $region3: #{perceptron_forward.1} parent=0 // pred_check_branch
    %9 = sbr.rel (0) target = $region5
  $region4: #{perceptron_forward.1} parent=0 // pred_region
    _
  $region5: #{perceptron_forward.1} parent=0 // pred_fallthru
    _
  // Predicated region
  $region6: #{perceptron_forward.1} parent=0 // pred_check
    _
  $region7: #{perceptron_forward.1} parent=0 // pred_check_branch
    %11 = sbr.rel (0) target = $region9
  $region8: #{perceptron_forward.1} parent=0 // pred_region
    _
  $region9: #{perceptron_forward.1} parent=0 // pred_fallthru
    _
  // Predicated region
  $region10: #{perceptron_forward.1} parent=0 // pred_check
    _
  $region11: #{perceptron_forward.1} parent=0 // pred_check_branch
    %13 = sbr.rel (0) target = $region13
  $region12: #{perceptron_forward.1} parent=0 // pred_region
    _
  $region13: #{perceptron_forward.1} parent=0 // pred_fallthru
    _
  %v14 = vld [vmem:[%s0] sm:$0x3]
  %v15 = vld [vmem:[%s1] sm:$0xff]
  %v16 = vld [vmem:[%s1 + $0x8] sm:$0xff]
  %v17 = vld [vmem:[%s1 + $0x10] sm:$0xff]
  %v18 = vld [vmem:[%s1 + $0x18] sm:$0xff]
  %v19 = vld [vmem:[%s1 + $0x20] sm:$0xff]
  %v20 = vld [vmem:[%s1 + $0x28] sm:$0xff]
  %v21 = vld [vmem:[%s1 + $0x30] sm:$0xff]
  %v22 = vld [vmem:[%s1 + $0x38] sm:$0xff]
  %v23 = vld [vmem:[%s1 + $0x40] sm:$0xff]
  %v24 = vld [vmem:[%s1 + $0x48] sm:$0xff]
  %v25 = vld [vmem:[%s1 + $0x50] sm:$0xff]
  %v26 = vld [vmem:[%s1 + $0x58] sm:$0xff]
  %v27 = vld [vmem:[%s1 + $0x60] sm:$0xff]
  %v28 = vld [vmem:[%s1 + $0x68] sm:$0xff]
  %v29 = vld [vmem:[%s1 + $0x70] sm:$0xff]
  %v30 = vld [vmem:[%s1 + $0x78] sm:$0xff]
  %v31 = vld [vmem:[%s1 + $0x80] sm:$0xff]
  %v32 = vld [vmem:[%s1 + $0x88] sm:$0xff]
  %v33 = vld [vmem:[%s1 + $0x90] sm:$0xff]
  %v34 = vld [vmem:[%s1 + $0x98] sm:$0xff]
  %v35 = vld [vmem:[%s1 + $0xa0] sm:$0xff]
  %v36 = vld [vmem:[%s1 + $0xa8] sm:$0xff]
  %v37 = vld [vmem:[%s1 + $0xb0] sm:$0xff]
  %v38 = vld [vmem:[%s1 + $0xb8] sm:$0xff]
  %v39 = vld [vmem:[%s1 + $0xc0] sm:$0xff]
  %v40 = vld [vmem:[%s1 + $0xc8] sm:$0xff]
  %v41 = vld [vmem:[%s1 + $0xd0] sm:$0xff]
  %v42 = vld [vmem:[%s1 + $0xd8] sm:$0xff]
  %v43 = vld [vmem:[%s1 + $0xe0] sm:$0xff]
  %v44 = vld [vmem:[%s1 + $0xe8] sm:$0xff]
  %v45 = vld [vmem:[%s1 + $0xf0] sm:$0xff]
  %v46 = vld [vmem:[%s1 + $0xf8] sm:$0xff]
  %v47 = vld [vmem:[%s1 + $0x100] sm:$0xff]
  %v48 = vld [vmem:[%s1 + $0x108] sm:$0xff]
  %v49 = vld [vmem:[%s1 + $0x110] sm:$0xff]
  %v50 = vld [vmem:[%s1 + $0x118] sm:$0xff]
  %v51 = vld [vmem:[%s1 + $0x120] sm:$0xff]
  %v52 = vld [vmem:[%s1 + $0x128] sm:$0xff]
  %v53 = vld [vmem:[%s1 + $0x130] sm:$0xff]
  %v54 = vld [vmem:[%s1 + $0x138] sm:$0xff]
  %v55 = vld [vmem:[%s1 + $0x140] sm:$0xff]
  %v56 = vld [vmem:[%s1 + $0x148] sm:$0xff]
  %v57 = vld [vmem:[%s1 + $0x150] sm:$0xff]
  %v58 = vld [vmem:[%s1 + $0x158] sm:$0xff]
  %v59 = vld [vmem:[%s1 + $0x160] sm:$0xff]
  %v60 = vld [vmem:[%s1 + $0x168] sm:$0xff]
  %v61 = vld [vmem:[%s1 + $0x170] sm:$0xff]
  %v62 = vld [vmem:[%s1 + $0x178] sm:$0xff]
  %v63 = vld [vmem:[%s1 + $0x180] sm:$0xff]
  %v64 = vld [vmem:[%s1 + $0x188] sm:$0xff]
  %v65 = vld [vmem:[%s1 + $0x190] sm:$0xff]
  %v66 = vld [vmem:[%s1 + $0x198] sm:$0xff]
  %v67 = vld [vmem:[%s1 + $0x1a0] sm:$0xff]
  %v68 = vld [vmem:[%s1 + $0x1a8] sm:$0xff]
  %v69 = vld [vmem:[%s1 + $0x1b0] sm:$0xff]
  %v70 = vld [vmem:[%s1 + $0x1b8] sm:$0xff]
  %v71 = vld [vmem:[%s1 + $0x1c0] sm:$0xff]
  %v72 = vld [vmem:[%s1 + $0x1c8] sm:$0xff]
  %v73 = vld [vmem:[%s1 + $0x1d0] sm:$0xff]
  %v74 = vld [vmem:[%s1 + $0x1d8] sm:$0xff]
  %v75 = vld [vmem:[%s1 + $0x1e0] sm:$0xff]
  %v76 = vld [vmem:[%s1 + $0x1e8] sm:$0xff]
  %v77 = vld [vmem:[%s1 + $0x1f0] sm:$0xff]
  %v78 = vld [vmem:[%s1 + $0x1f8] sm:$0xff]
  %v79 = vld [vmem:[%s1 + $0x200] sm:$0xff]
  %v80 = vld [vmem:[%s1 + $0x208] sm:$0xff]
  %v81 = vld [vmem:[%s1 + $0x210] sm:$0xff]
  %v82 = vld [vmem:[%s1 + $0x218] sm:$0xff]
  %v83 = vld [vmem:[%s1 + $0x220] sm:$0xff]
  %v84 = vld [vmem:[%s1 + $0x228] sm:$0xff]
  %v85 = vld [vmem:[%s1 + $0x230] sm:$0xff]
  %v86 = vld [vmem:[%s1 + $0x238] sm:$0xff]
  %v87 = vld [vmem:[%s1 + $0x240] sm:$0xff]
  %v88 = vld [vmem:[%s1 + $0x248] sm:$0xff]
  %v89 = vld [vmem:[%s1 + $0x250] sm:$0xff]
  %v90 = vld [vmem:[%s1 + $0x258] sm:$0xff]
  %v91 = vld [vmem:[%s1 + $0x260] sm:$0xff]
  %v92 = vld [vmem:[%s1 + $0x268] sm:$0xff]
  %v93 = vld [vmem:[%s1 + $0x270] sm:$0xff]
  %v94 = vld [vmem:[%s1 + $0x278] sm:$0xff]
  %v95 = vld [vmem:[%s1 + $0x280] sm:$0xff]
  %v96 = vld [vmem:[%s1 + $0x288] sm:$0xff]
  %v97 = vld [vmem:[%s1 + $0x290] sm:$0xff]
  %v98 = vld [vmem:[%s1 + $0x298] sm:$0xff]
  %v99 = vld [vmem:[%s1 + $0x2a0] sm:$0xff]
  %v100 = vld [vmem:[%s1 + $0x2a8] sm:$0xff]
  %v101 = vld [vmem:[%s1 + $0x2b0] sm:$0xff]
  %v102 = vld [vmem:[%s1 + $0x2b8] sm:$0xff]
  %v103 = vld [vmem:[%s1 + $0x2c0] sm:$0xff]
  %v104 = vld [vmem:[%s1 + $0x2c8] sm:$0xff]
  %v105 = vld [vmem:[%s1 + $0x2d0] sm:$0xff]
  %v106 = vld [vmem:[%s1 + $0x2d8] sm:$0xff]
  %v107 = vld [vmem:[%s1 + $0x2e0] sm:$0xff]
  %v108 = vld [vmem:[%s1 + $0x2e8] sm:$0xff]
  %v109 = vld [vmem:[%s1 + $0x2f0] sm:$0xff]
  %v110 = vld [vmem:[%s1 + $0x2f8] sm:$0xff]
  %v111 = vld [vmem:[%s1 + $0x300] sm:$0xff]
  %v112 = vld [vmem:[%s1 + $0x308] sm:$0xff]
  %v113 = vld [vmem:[%s1 + $0x310] sm:$0xff]
  %v114 = vld [vmem:[%s1 + $0x318] sm:$0xff]
  %v115 = vld [vmem:[%s1 + $0x320] sm:$0xff]
  %v116 = vld [vmem:[%s1 + $0x328] sm:$0xff]
  %v117 = vld [vmem:[%s1 + $0x330] sm:$0xff]
  %v118 = vld [vmem:[%s1 + $0x338] sm:$0xff]
  %v119 = vld [vmem:[%s1 + $0x340] sm:$0xff]
  %v120 = vld [vmem:[%s1 + $0x348] sm:$0xff]
  %v121 = vld [vmem:[%s1 + $0x350] sm:$0xff]
  %v122 = vld [vmem:[%s1 + $0x358] sm:$0xff]
  %v123 = vld [vmem:[%s1 + $0x360] sm:$0xff]
  %v124 = vld [vmem:[%s1 + $0x368] sm:$0xff]
  %v125 = vld [vmem:[%s1 + $0x370] sm:$0xff]
  %v126 = vld [vmem:[%s1 + $0x378] sm:$0xff]
  %v127 = vld [vmem:[%s1 + $0x380] sm:$0xff]
  %v128 = vld [vmem:[%s1 + $0x388] sm:$0xff]
  %v129 = vld [vmem:[%s1 + $0x390] sm:$0xff]
  %v130 = vld [vmem:[%s1 + $0x398] sm:$0xff]
  %v131 = vld [vmem:[%s1 + $0x3a0] sm:$0xff]
  %v132 = vld [vmem:[%s1 + $0x3a8] sm:$0xff]
  %v133 = vld [vmem:[%s1 + $0x3b0] sm:$0xff]
  %v134 = vld [vmem:[%s1 + $0x3b8] sm:$0xff]
  %v135 = vld [vmem:[%s1 + $0x3c0] sm:$0xff]
  %v136 = vld [vmem:[%s1 + $0x3c8] sm:$0xff]
  %v137 = vld [vmem:[%s1 + $0x3d0] sm:$0xff]
  %v138 = vld [vmem:[%s1 + $0x3d8] sm:$0xff]
  %v139 = vld [vmem:[%s1 + $0x3e0] sm:$0xff]
  %v140 = vld [vmem:[%s1 + $0x3e8] sm:$0xff]
  %v141 = vld [vmem:[%s1 + $0x3f0] sm:$0xff]
  %v142 = vld [vmem:[%s1 + $0x3f8] sm:$0xff]
  %v143 = vld [vmem:[%s1 + $0x400] sm:$0xff]
  %v144 = vld [vmem:[%s1 + $0x408] sm:$0xff]
  %v145 = vld [vmem:[%s1 + $0x410] sm:$0xff]
  %v146 = vld [vmem:[%s1 + $0x418] sm:$0xff]
  %v147 = vld [vmem:[%s1 + $0x420] sm:$0xff]
  %v148 = vld [vmem:[%s1 + $0x428] sm:$0xff]
  %v149 = vld [vmem:[%s1 + $0x430] sm:$0xff]
  %v150 = vld [vmem:[%s1 + $0x438] sm:$0xff]
  %v151 = vld [vmem:[%s1 + $0x440] sm:$0xff]
  %v152 = vld [vmem:[%s1 + $0x448] sm:$0xff]
  %v153 = vld [vmem:[%s1 + $0x450] sm:$0xff]
  %v154 = vld [vmem:[%s1 + $0x458] sm:$0xff]
  %v155 = vld [vmem:[%s1 + $0x460] sm:$0xff]
  %v156 = vld [vmem:[%s1 + $0x468] sm:$0xff]
  %v157 = vld [vmem:[%s1 + $0x470] sm:$0xff]
  %v158 = vld [vmem:[%s1 + $0x478] sm:$0xff]
  %v159 = vld [vmem:[%s1 + $0x480] sm:$0xff]
  %v160 = vld [vmem:[%s1 + $0x488] sm:$0xff]
  %v161 = vld [vmem:[%s1 + $0x490] sm:$0xff]
  %v162 = vld [vmem:[%s1 + $0x498] sm:$0xff]
  %v163 = vld [vmem:[%s1 + $0x4a0] sm:$0xff]
  %v164 = vld [vmem:[%s1 + $0x4a8] sm:$0xff]
  %v165 = vld [vmem:[%s1 + $0x4b0] sm:$0xff]
  %v166 = vld [vmem:[%s1 + $0x4b8] sm:$0xff]
  %v167 = vld [vmem:[%s1 + $0x4c0] sm:$0xff]
  %v168 = vld [vmem:[%s1 + $0x4c8] sm:$0xff]
  %v169 = vld [vmem:[%s1 + $0x4d0] sm:$0xff]
  %v170 = vld [vmem:[%s1 + $0x4d8] sm:$0xff]
  %v171 = vld [vmem:[%s1 + $0x4e0] sm:$0xff]
  %v172 = vld [vmem:[%s1 + $0x4e8] sm:$0xff]
  %v173 = vld [vmem:[%s1 + $0x4f0] sm:$0xff]
  %v174 = vld [vmem:[%s1 + $0x4f8] sm:$0xff]
  %v175 = vld [vmem:[%s2] sm:$0x1f]
  %v177 = vlaneseq
  %v178 = vshrl.u32 %v177, 7
  %v179 = vsub.s32 0, %v178
  %v180 = vrot.slane %v14, %v179
  %v181 = vlaneseq
  %v182 = vshrl.u32 %v181, 7
  %v183 = vsub.s32 1, %v182
  %v184 = vrot.slane %v14, %v183
  %v188 = vlaneseq
  %v189 = vshrl.u32 %v188, 7
  %v190 = vsub.s32 0, %v189
  %v191 = vrot.slane %v175, %v190
  %v192 = vlaneseq
  %v193 = vshrl.u32 %v192, 7
  %v194 = vsub.s32 1, %v193
  %v195 = vrot.slane %v175, %v194
  %v196 = vlaneseq
  %v197 = vshrl.u32 %v196, 7
  %v198 = vsub.s32 2, %v197
  %v199 = vrot.slane %v175, %v198
  %v200 = vlaneseq
  %v201 = vshrl.u32 %v200, 7
  %v202 = vsub.s32 3, %v201
  %v203 = vrot.slane %v175, %v202
  %v204 = vlaneseq
  %v205 = vshrl.u32 %v204, 7
  %v206 = vsub.s32 4, %v205
  %v207 = vrot.slane %v175, %v206
  %213 = vmatprep.subr.mxu0 %v91
  %214 = vmatpush1.msra.mxu0 %v90
  %215 = vmatprep.subr.mxu0 %v86
  %216 = vmatpush1.msra.mxu0 %v85
  %217 = vmatprep.subr.mxu0 %v81
  %218 = vmatpush1.msra.mxu0 %v80
  %219 = vmatprep.subr.mxu0 %v76
  %220 = vmatpush1.msra.mxu0 %v75
  %221 = vmatprep.subr.mxu0 %v71
  %222 = vmatpush1.msra.mxu0 %v70
  %223 = vmatprep.subr.mxu0 %v66
  %224 = vmatpush1.msra.mxu0 %v65
  %225 = vmatprep.subr.mxu0 %v61
  %226 = vmatpush1.msra.mxu0 %v60
  %227 = vmatprep.subr.mxu0 %v56
  %228 = vmatpush1.msra.mxu0 %v55
  %229 = vmatprep.subr.mxu0 %v51
  %230 = vmatpush1.msra.mxu0 %v50
  %231 = vmatprep.subr.mxu0 %v46
  %232 = vmatpush1.msra.mxu0 %v45
  %233 = vmatprep.subr.mxu0 %v41
  %234 = vmatpush1.msra.mxu0 %v40
  %235 = vmatprep.subr.mxu0 %v36
  %236 = vmatpush1.msra.mxu0 %v35
  %237 = vmatprep.subr.mxu0 %v31
  %238 = vmatpush1.msra.mxu0 %v30
  %239 = vmatprep.subr.mxu0 %v26
  %240 = vmatpush1.msra.mxu0 %v25
  %241 = vmatprep.subr.mxu0 %v21
  %242 = vmatpush1.msra.mxu0 %v20
  %243 = vmatprep.subr.mxu0 %v16
  %244 = vmatpush1.msra.mxu0 %v15
  %245 = vmatprep.subr.mxu0 %v171
  %246 = vmatpush2.msra.mxu0 %v170
  %247 = vmatprep.subr.mxu0 %v166
  %248 = vmatpush2.msra.mxu0 %v165
  %249 = vmatprep.subr.mxu0 %v161
  %250 = vmatpush2.msra.mxu0 %v160
  %251 = vmatprep.subr.mxu0 %v156
  %252 = vmatpush2.msra.mxu0 %v155
  %253 = vmatprep.subr.mxu0 %v151
  %254 = vmatpush2.msra.mxu0 %v150
  %255 = vmatprep.subr.mxu0 %v146
  %256 = vmatpush2.msra.mxu0 %v145
  %257 = vmatprep.subr.mxu0 %v141
  %258 = vmatpush2.msra.mxu0 %v140
  %259 = vmatprep.subr.mxu0 %v136
  %260 = vmatpush2.msra.mxu0 %v135
  %261 = vmatprep.subr.mxu0 %v131
  %262 = vmatpush2.msra.mxu0 %v130
  %263 = vmatprep.subr.mxu0 %v126
  %264 = vmatpush2.msra.mxu0 %v125
  %265 = vmatprep.subr.mxu0 %v121
  %266 = vmatpush2.msra.mxu0 %v120
  %267 = vmatprep.subr.mxu0 %v116
  %268 = vmatpush2.msra.mxu0 %v115
  %269 = vmatprep.subr.mxu0 %v111
  %270 = vmatpush2.msra.mxu0 %v110
  %271 = vmatprep.subr.mxu0 %v106
  %272 = vmatpush2.msra.mxu0 %v105
  %273 = vmatprep.subr.mxu0 %v101
  %274 = vmatpush2.msra.mxu0 %v100
  %275 = vmatprep.subr.mxu0 %v96
  %276 = vmatpush2.msra.mxu0 %v95
  %277 = vmatprep.mubr.f32.mxu0 %v184
  %278 = vmatmul.mubr.f32.gmra.mxu0 %v180
  %v279 = vpop.f32.mrf.mxu0
  %v280 = vadd.f32 %v191, %v279
  %v281 = vpop.f32.mrf.mxu0
  %v282 = vadd.f32 %v195, %v281
  %283 = vdwg.mxu0
  %284 = vmatprep.subr.mxu0 %v93
  %285 = vmatpush1.msra.mxu0 %v92
  %286 = vmatprep.subr.mxu0 %v88
  %287 = vmatpush1.msra.mxu0 %v87
  %288 = vmatprep.subr.mxu0 %v83
  %289 = vmatpush1.msra.mxu0 %v82
  %290 = vmatprep.subr.mxu0 %v78
  %291 = vmatpush1.msra.mxu0 %v77
  %292 = vmatprep.subr.mxu0 %v73
  %293 = vmatpush1.msra.mxu0 %v72
  %294 = vmatprep.subr.mxu0 %v68
  %295 = vmatpush1.msra.mxu0 %v67
  %296 = vmatprep.subr.mxu0 %v63
  %297 = vmatpush1.msra.mxu0 %v62
  %298 = vmatprep.subr.mxu0 %v58
  %299 = vmatpush1.msra.mxu0 %v57
  %300 = vmatprep.subr.mxu0 %v53
  %301 = vmatpush1.msra.mxu0 %v52
  %302 = vmatprep.subr.mxu0 %v48
  %303 = vmatpush1.msra.mxu0 %v47
  %304 = vmatprep.subr.mxu0 %v43
  %305 = vmatpush1.msra.mxu0 %v42
  %306 = vmatprep.subr.mxu0 %v38
  %307 = vmatpush1.msra.mxu0 %v37
  %308 = vmatprep.subr.mxu0 %v33
  %309 = vmatpush1.msra.mxu0 %v32
  %310 = vmatprep.subr.mxu0 %v28
  %311 = vmatpush1.msra.mxu0 %v27
  %312 = vmatprep.subr.mxu0 %v23
  %313 = vmatpush1.msra.mxu0 %v22
  %314 = vmatprep.subr.mxu0 %v18
  %315 = vmatpush1.msra.mxu0 %v17
  %316 = vmatprep.subr.mxu0 %v173
  %317 = vmatpush2.msra.mxu0 %v172
  %318 = vmatprep.subr.mxu0 %v168
  %319 = vmatpush2.msra.mxu0 %v167
  %320 = vmatprep.subr.mxu0 %v163
  %321 = vmatpush2.msra.mxu0 %v162
  %322 = vmatprep.subr.mxu0 %v158
  %323 = vmatpush2.msra.mxu0 %v157
  %324 = vmatprep.subr.mxu0 %v153
  %325 = vmatpush2.msra.mxu0 %v152
  %326 = vmatprep.subr.mxu0 %v148
  %327 = vmatpush2.msra.mxu0 %v147
  %328 = vmatprep.subr.mxu0 %v143
  %329 = vmatpush2.msra.mxu0 %v142
  %330 = vmatprep.subr.mxu0 %v138
  %331 = vmatpush2.msra.mxu0 %v137
  %332 = vmatprep.subr.mxu0 %v133
  %333 = vmatpush2.msra.mxu0 %v132
  %334 = vmatprep.subr.mxu0 %v128
  %335 = vmatpush2.msra.mxu0 %v127
  %336 = vmatprep.subr.mxu0 %v123
  %337 = vmatpush2.msra.mxu0 %v122
  %338 = vmatprep.subr.mxu0 %v118
  %339 = vmatpush2.msra.mxu0 %v117
  %340 = vmatprep.subr.mxu0 %v113
  %341 = vmatpush2.msra.mxu0 %v112
  %342 = vmatprep.subr.mxu0 %v108
  %343 = vmatpush2.msra.mxu0 %v107
  %344 = vmatprep.subr.mxu0 %v103
  %345 = vmatpush2.msra.mxu0 %v102
  %346 = vmatprep.subr.mxu0 %v98
  %347 = vmatpush2.msra.mxu0 %v97
  %348 = vmatprep.mubr.f32.mxu0 %v184
  %349 = vmatmul.mubr.f32.gmra.mxu0 %v180
  %v350 = vpop.f32.mrf.mxu0
  %v351 = vadd.f32 %v199, %v350
  %v352 = vpop.f32.mrf.mxu0
  %v353 = vadd.f32 %v203, %v352
  %354 = vdwg.mxu0
  %355 = vmatprep.subr.mxu0 0.0
  %356 = vmatpush1.msra.mxu0 %v94
  %357 = vmatprep.subr.mxu0 0.0
  %358 = vmatpush1.msra.mxu0 %v89
  %359 = vmatprep.subr.mxu0 0.0
  %360 = vmatpush1.msra.mxu0 %v84
  %361 = vmatprep.subr.mxu0 0.0
  %362 = vmatpush1.msra.mxu0 %v79
  %363 = vmatprep.subr.mxu0 0.0
  %364 = vmatpush1.msra.mxu0 %v74
  %365 = vmatprep.subr.mxu0 0.0
  %366 = vmatpush1.msra.mxu0 %v69
  %367 = vmatprep.subr.mxu0 0.0
  %368 = vmatpush1.msra.mxu0 %v64
  %369 = vmatprep.subr.mxu0 0.0
  %370 = vmatpush1.msra.mxu0 %v59
  %371 = vmatprep.subr.mxu0 0.0
  %372 = vmatpush1.msra.mxu0 %v54
  %373 = vmatprep.subr.mxu0 0.0
  %374 = vmatpush1.msra.mxu0 %v49
  %375 = vmatprep.subr.mxu0 0.0
  %376 = vmatpush1.msra.mxu0 %v44
  %377 = vmatprep.subr.mxu0 0.0
  %378 = vmatpush1.msra.mxu0 %v39
  %379 = vmatprep.subr.mxu0 0.0
  %380 = vmatpush1.msra.mxu0 %v34
  %381 = vmatprep.subr.mxu0 0.0
  %382 = vmatpush1.msra.mxu0 %v29
  %383 = vmatprep.subr.mxu0 0.0
  %384 = vmatpush1.msra.mxu0 %v24
  %385 = vmatprep.subr.mxu0 0.0
  %386 = vmatpush1.msra.mxu0 %v19
  %387 = vmatprep.subr.mxu0 0.0
  %388 = vmatpush2.msra.mxu0 %v174
  %389 = vmatprep.subr.mxu0 0.0
  %390 = vmatpush2.msra.mxu0 %v169
  %391 = vmatprep.subr.mxu0 0.0
  %392 = vmatpush2.msra.mxu0 %v164
  %393 = vmatprep.subr.mxu0 0.0
  %394 = vmatpush2.msra.mxu0 %v159
  %395 = vmatprep.subr.mxu0 0.0
  %396 = vmatpush2.msra.mxu0 %v154
  %397 = vmatprep.subr.mxu0 0.0
  %398 = vmatpush2.msra.mxu0 %v149
  %399 = vmatprep.subr.mxu0 0.0
  %400 = vmatpush2.msra.mxu0 %v144
  %401 = vmatprep.subr.mxu0 0.0
  %402 = vmatpush2.msra.mxu0 %v139
  %403 = vmatprep.subr.mxu0 0.0
  %404 = vmatpush2.msra.mxu0 %v134
  %405 = vmatprep.subr.mxu0 0.0
  %406 = vmatpush2.msra.mxu0 %v129
  %407 = vmatprep.subr.mxu0 0.0
  %408 = vmatpush2.msra.mxu0 %v124
  %409 = vmatprep.subr.mxu0 0.0
  %410 = vmatpush2.msra.mxu0 %v119
  %411 = vmatprep.subr.mxu0 0.0
  %412 = vmatpush2.msra.mxu0 %v114
  %413 = vmatprep.subr.mxu0 0.0
  %414 = vmatpush2.msra.mxu0 %v109
  %415 = vmatprep.subr.mxu0 0.0
  %416 = vmatpush2.msra.mxu0 %v104
  %417 = vmatprep.subr.mxu0 0.0
  %418 = vmatpush2.msra.mxu0 %v99
  %419 = vmatprep.mubr.f32.mxu0 %v184
  %420 = vmatmul.mubr.f32.gmra.mxu0 %v180
  %v421 = vpop.f32.mrf.mxu0
  %v422 = vadd.f32 %v207, %v421
  %v423 = vpop.f32.mrf.mxu0
  %424 = vdwg.mxu0
  %v430 = vcombine.low %v280, %v282
  %v431 = vcombine.low %v351, %v353
  %v433 = vunpack.c.l.s4 1966171168
  %v434 = vunpack.c.0.s8 %v433
  %v435 = vlaneseq
  %v436 = vshrl.u32 %v435, 7
  %v437 = vsub.s32 %v434, %v436
  %v438 = vrot.slane %v430, %v437
  %v440 = vunpack.c.l.s4 1966171168
  %v441 = vunpack.c.0.s8 %v440
  %v442 = vlaneseq
  %v443 = vshrl.u32 %v442, 7
  %v444 = vsub.s32 %v441, %v443
  %v445 = vrot.slane %v431, %v444
  %v447 = vunpack.c.l.s4 1966171168
  %v448 = vunpack.c.0.s8 %v447
  %v449 = vlaneseq
  %v450 = vshrl.u32 %v449, 7
  %v451 = vsub.s32 %v448, %v450
  %v452 = vrot.slane %v422, %v451
  %v453 = vcombine.low %v438, %v445
  %v455 = vunpack.c.l.s4 1966171168
  %v456 = vunpack.c.0.s8 %v455
  %v457 = vlaneseq
  %v458 = vshrl.u32 %v457, 7
  %v459 = vsub.s32 %v456, %v458
  %v460 = vrot.slane %v453, %v459
  %v462 = vunpack.c.l.s4 1966171168
  %v463 = vunpack.c.0.s8 %v462
  %v464 = vlaneseq
  %v465 = vshrl.u32 %v464, 7
  %v466 = vsub.s32 %v463, %v465
  %v467 = vrot.slane %v452, %v466
  %v468 = vcombine.low %v460, %v467
  %v470 = vlaneseq
  %vm471 = vcmp.ge.s32.totalorder %v470, 0
  %vm472 = vcmp.lt.s32.totalorder %v470, 640
  %vm473 = vmand %vm471, %vm472
  %474 = vst.msk [vmem:[%s3] sm:$0x1f] %vm473, %v468
  // Predicated region
  $region14: #{perceptron_forward.1} parent=0 // pred_check
    _
  $region15: #{perceptron_forward.1} parent=0 // pred_check_branch
    %476 = sbr.rel (0) target = $region17
  $region16: #{perceptron_forward.1} parent=0 // pred_region
    _
  $region17: #{perceptron_forward.1} parent=0 // pred_fallthru
    _
  // Predicated region
  $region18: #{perceptron_forward.1} parent=0 // pred_check
    _
  $region19: #{perceptron_forward.1} parent=0 // pred_check_branch
    %478 = sbr.rel (0) target = $region21
  $region20: #{perceptron_forward.1} parent=0 // pred_region
    _
  $region21: #{perceptron_forward.1} parent=0 // pred_fallthru
    _

</llo_original>
